<compile_context>
chip_gen: v5e
topology: v5e:2x2
jax: 0.10.0
libtpu: 0.0.40
codegen_flags: <defaults>
</compile_context>

<pallas_src>
import jax
import jax.numpy as jnp
from jax.experimental import pallas as pl
from jax.experimental.pallas import tpu as pltpu


def _round_up(x, m):
    return ((x + m - 1) // m) * m


def condition_net_kernel(x_ref, y_ref, w1x_ref, w1y_ref, b1_ref, w2_ref,
                         b2_ref, out_ref):
    # fc1: two accumulating MXU dots on the un-concatenated inputs (f32 acc).
    h = jnp.dot(x_ref[...], w1x_ref[...], preferred_element_type=jnp.float32)
    h = h + jnp.dot(y_ref[...], w1y_ref[...],
                    preferred_element_type=jnp.float32)
    h = jnp.maximum(h + b1_ref[...], 0.0)           # bias + relu (VPU)
    # fc2: (tb,128) @ (128,1) on the MXU -> no cross-lane XLU reduce.
    out = jnp.dot(h, w2_ref[...], preferred_element_type=jnp.float32)
    out_ref[...] = (out + b2_ref[0, 0]).astype(out_ref.dtype)


def condition_net_forward(x_t, y_condition, params, *, block_b=8192,
                          stream_dtype=None):
    """Pallas-backed forward pass. x_t: (B, D1), y_condition: (B, D2)."""
    w1, b1, w2, b2 = params["w1"], params["b1"], params["w2"], params["b2"]
    b, d1 = x_t.shape
    d2 = y_condition.shape[-1]
    hidden = w1.shape[-1]

    if b == 0:                                       # empty-batch guard
        return jnp.zeros((0, 1), jnp.float32)

    # Parameter plumbing (weights are tiny; these slices/reshapes are cheap).
    w1x = w1[:d1]                                    # (d1, 128)
    w1y = w1[d1:]                                    # (d2, 128)
    b1_2d = b1.reshape(1, hidden)                    # (1, 128)
    w2_col = w2.reshape(hidden, 1)                   # (128, 1)
    b2_2d = b2.reshape(1, 1).astype(jnp.float32)     # SMEM scalar

    if stream_dtype is not None:
        # TODO(synk): fold these casts into whatever produces x_t/y_condition
        # upstream so they don't become standalone HBM passes.
        x_t = x_t.astype(stream_dtype)
        y_condition = y_condition.astype(stream_dtype)
        w1x = w1x.astype(stream_dtype)
        w1y = w1y.astype(stream_dtype)

    # Batch tile: multiple of 8 sublanes, big enough to amortize the ~0.35us
    # per-grid-step fixed cost, small enough for v7x's 64 MiB VMEM, and for
    # large batches capped so the grid keeps >= 2 steps (dual-TC chips).
    tb = max(8, min(block_b, _round_up(b, 8)))
    tb = _round_up(tb, 8)
    if b > 4096 and pl.cdiv(b, tb) < 2:
        tb = _round_up(pl.cdiv(b, 2), 8)
    grid = (pl.cdiv(b, tb),)

    # VMEM budget: (tb, d<128) f32 blocks are lane-padded to 128 lanes.
    lane_row_bytes = 128 * 4
    est = tb * lane_row_bytes * 7     # x, y, out double-buffered + h temp
    vmem_limit = int(min(100 << 20, max(32 << 20, est + (8 << 20))))

    out = pl.pallas_call(
        condition_net_kernel,
        out_shape=jax.ShapeDtypeStruct((b, 1), jnp.float32),
        grid=grid,
        in_specs=[
            # Activation tiles stream (double-buffered by the pipeline).
            pl.BlockSpec((tb, d1), lambda i: (i, 0)),
            pl.BlockSpec((tb, d2), lambda i: (i, 0)),
            # Weights / biases: same block every step -> VMEM-resident.
            pl.BlockSpec((d1, hidden), lambda i: (0, 0)),
            pl.BlockSpec((d2, hidden), lambda i: (0, 0)),
            pl.BlockSpec((1, hidden), lambda i: (0, 0)),
            pl.BlockSpec((hidden, 1), lambda i: (0, 0)),
            # b2 as an SMEM scalar (no padded (8,128) VMEM tile / DMA).
            pl.BlockSpec(memory_space=pltpu.MemorySpace.SMEM),
        ],
        out_specs=pl.BlockSpec((tb, 1), lambda i: (i, 0)),
        compiler_params=pltpu.CompilerParams(
            dimension_semantics=("parallel",),
            vmem_limit_bytes=vmem_limit),
    )(x_t, y_condition, w1x, w1y, b1_2d, w2_col, b2_2d)

    return out


def init_condition_net_params(key, input_dim, condition_dim, hidden=128):
    """Deterministic init mirroring nn.Linear's U(-1/sqrt(fan_in), +1/sqrt(fan_in))."""
    k1, k2, k3, k4 = jax.random.split(key, 4)
    fan1 = input_dim + condition_dim
    bound1 = 1.0 / jnp.sqrt(fan1)
    bound2 = 1.0 / jnp.sqrt(hidden)
    # Stored as (in_features, out_features) so the kernel does x @ W directly.
    w1 = jax.random.uniform(k1, (fan1, hidden), jnp.float32, -bound1, bound1)
    b1 = jax.random.uniform(k2, (hidden,), jnp.float32, -bound1, bound1)
    w2 = jax.random.uniform(k3, (hidden, 1), jnp.float32, -bound2, bound2)
    b2 = jax.random.uniform(k4, (1,), jnp.float32, -bound2, bound2)
    return {"w1": w1, "b1": b1, "w2": w2, "b2": b2}


def reference_forward(x_t, y_condition, params):
    """Pure-JAX reference matching the PyTorch module exactly."""
    xc = jnp.concatenate([x_t, y_condition], axis=-1)
    h = jnp.maximum(xc @ params["w1"] + params["b1"], 0.0)
    return h @ params["w2"] + params["b2"]


if __name__ == "__main__":
    key = jax.random.PRNGKey(0)
    kx, ky, kp, kx2, ky2 = jax.random.split(key, 5)

    input_dim = 12
    condition_dim = 4
    params = init_condition_net_params(kp, input_dim, condition_dim)

    # Small case (single grid step, tile == rounded-up batch).
    batch = 8
    x_t = jax.random.normal(kx, (batch, input_dim), jnp.float32)
    y_condition = jax.random.normal(ky, (batch, condition_dim), jnp.float32)
    out = jax.block_until_ready(condition_net_forward(x_t, y_condition, params))
    ref = reference_forward(x_t, y_condition, params)
    assert out.shape == (batch, 1), out.shape
    assert jnp.allclose(out, ref, atol=2e-5, rtol=2e-5)

    # Ragged multi-tile case: exercises the batch grid + the masked partial
    # last block (no wrapper-side padding).
    batch2 = 300
    x_t2 = jax.random.normal(kx2, (batch2, input_dim), jnp.float32)
    y_condition2 = jax.random.normal(ky2, (batch2, condition_dim), jnp.float32)
    out2 = jax.block_until_ready(
        condition_net_forward(x_t2, y_condition2, params, block_b=128))
    ref2 = reference_forward(x_t2, y_condition2, params)
    assert out2.shape == (batch2, 1), out2.shape
    assert jnp.allclose(out2, ref2, atol=2e-5, rtol=2e-5)

    print("KERNEL_OK")
</pallas_src>

<mosaic_0001>
module attributes {stable_mosaic.version = 11 : i64} {
  func.func @condition_net_kernel(%arg0: i32, %arg1: memref<8x12xf32, #tpu.memory_space<vmem>>, %arg2: memref<8x4xf32, #tpu.memory_space<vmem>>, %arg3: memref<12x128xf32, #tpu.memory_space<vmem>>, %arg4: memref<4x128xf32, #tpu.memory_space<vmem>>, %arg5: memref<1x128xf32, #tpu.memory_space<vmem>>, %arg6: memref<128x1xf32, #tpu.memory_space<vmem>>, %arg7: memref<1x1xf32, #tpu.memory_space<smem>>, %arg8: memref<8x1xf32, #tpu.memory_space<vmem>>) attributes {dimension_semantics = [#tpu.dimension_semantics<parallel>], iteration_bounds = array<i64: 1>, scalar_prefetch = 0 : i64, scratch_operands = 0 : i64, tpu.core_type = #tpu.core_type<tc>, window_params = [{transform_indices = @transform_0, window_bounds = array<i64: 8, 12>}, {transform_indices = @transform_1, window_bounds = array<i64: 8, 4>}, {pipeline_mode = #tpu.pipeline_mode<synchronous>, transform_indices = @transform_2, window_bounds = array<i64: 12, 128>}, {pipeline_mode = #tpu.pipeline_mode<synchronous>, transform_indices = @transform_3, window_bounds = array<i64: 4, 128>}, {pipeline_mode = #tpu.pipeline_mode<synchronous>, transform_indices = @transform_4, window_bounds = array<i64: 1, 128>}, {pipeline_mode = #tpu.pipeline_mode<synchronous>, transform_indices = @transform_5, window_bounds = array<i64: 128, 1>}, {transform_indices = @transform_6, window_bounds = array<i64: 1, 1>}, {transform_indices = @transform_7, window_bounds = array<i64: 8, 1>}]} {
    %c0 = arith.constant 0 : index
    %c0_0 = arith.constant 0 : index
    %0 = vector.load %arg1[%c0, %c0_0] : memref<8x12xf32, #tpu.memory_space<vmem>>, vector<8x12xf32>
    %c0_1 = arith.constant 0 : index
    %c0_2 = arith.constant 0 : index
    %1 = vector.load %arg3[%c0_1, %c0_2] : memref<12x128xf32, #tpu.memory_space<vmem>>, vector<12x128xf32>
    %cst = arith.constant dense<0.000000e+00> : vector<8x128xf32>
    %2 = tpu.matmul %0, %1, %cst {dimension_numbers = #tpu.dot_dimension_numbers<[1], [0], [0], [1], [0, 0, 1, 1], [], []>} : vector<8x12xf32>, vector<12x128xf32>, vector<8x128xf32> -> vector<8x128xf32>
    %c0_3 = arith.constant 0 : index
    %c0_4 = arith.constant 0 : index
    %3 = vector.load %arg2[%c0_3, %c0_4] : memref<8x4xf32, #tpu.memory_space<vmem>>, vector<8x4xf32>
    %c0_5 = arith.constant 0 : index
    %c0_6 = arith.constant 0 : index
    %4 = vector.load %arg4[%c0_5, %c0_6] : memref<4x128xf32, #tpu.memory_space<vmem>>, vector<4x128xf32>
    %cst_7 = arith.constant dense<0.000000e+00> : vector<8x128xf32>
    %5 = tpu.matmul %3, %4, %cst_7 {dimension_numbers = #tpu.dot_dimension_numbers<[1], [0], [0], [1], [0, 0, 1, 1], [], []>} : vector<8x4xf32>, vector<4x128xf32>, vector<8x128xf32> -> vector<8x128xf32>
    %6 = arith.addf %2, %5 : vector<8x128xf32>
    %c0_8 = arith.constant 0 : index
    %c0_9 = arith.constant 0 : index
    %7 = vector.load %arg5[%c0_8, %c0_9] : memref<1x128xf32, #tpu.memory_space<vmem>>, vector<1x128xf32>
    %8 = vector.broadcast %7 : vector<1x128xf32> to vector<8x128xf32>
    %9 = arith.addf %6, %8 : vector<8x128xf32>
    %cst_10 = arith.constant 0.000000e+00 : f32
    %10 = vector.broadcast %cst_10 : f32 to vector<8x128xf32>
    %11 = arith.maximumf %9, %10 : vector<8x128xf32>
    %c0_11 = arith.constant 0 : index
    %c0_12 = arith.constant 0 : index
    %12 = vector.load %arg6[%c0_11, %c0_12] : memref<128x1xf32, #tpu.memory_space<vmem>>, vector<128x1xf32>
    %cst_13 = arith.constant dense<0.000000e+00> : vector<8x1xf32>
    %13 = tpu.matmul %11, %12, %cst_13 {dimension_numbers = #tpu.dot_dimension_numbers<[1], [0], [0], [1], [0, 0, 1, 1], [], []>} : vector<8x128xf32>, vector<128x1xf32>, vector<8x1xf32> -> vector<8x1xf32>
    %c0_14 = arith.constant 0 : index
    %c0_15 = arith.constant 0 : index
    %14 = memref.load %arg7[%c0_14, %c0_15] : memref<1x1xf32, #tpu.memory_space<smem>>
    %15 = vector.broadcast %14 : f32 to vector<8x1xf32>
    %16 = arith.addf %13, %15 : vector<8x1xf32>
    %c0_16 = arith.constant 0 : index
    %c0_17 = arith.constant 0 : index
    %17 = vector.load %arg8[%c0_16, %c0_17] : memref<8x1xf32, #tpu.memory_space<vmem>>, vector<8x1xf32>
    tpu.vector_store %arg8[%c0_16, %c0_17], %16 {strides = array<i32>} : memref<8x1xf32, #tpu.memory_space<vmem>>, vector<8x1xf32>,
    return
  }
  func.func @transform_0(%arg0: i32) -> (i32, i32) {
    %c0_i32 = arith.constant 0 : i32
    %c0_i32_0 = arith.constant 0 : i32
    return %arg0, %c0_i32 : i32, i32
  }
  func.func @transform_1(%arg0: i32) -> (i32, i32) {
    %c0_i32 = arith.constant 0 : i32
    %c0_i32_0 = arith.constant 0 : i32
    return %arg0, %c0_i32 : i32, i32
  }
  func.func @transform_2(%arg0: i32) -> (i32, i32) {
    %c0_i32 = arith.constant 0 : i32
    %c0_i32_0 = arith.constant 0 : i32
    %c0_i32_1 = arith.constant 0 : i32
    return %c0_i32, %c0_i32_0 : i32, i32
  }
  func.func @transform_3(%arg0: i32) -> (i32, i32) {
    %c0_i32 = arith.constant 0 : i32
    %c0_i32_0 = arith.constant 0 : i32
    %c0_i32_1 = arith.constant 0 : i32
    return %c0_i32, %c0_i32_0 : i32, i32
  }
  func.func @transform_4(%arg0: i32) -> (i32, i32) {
    %c0_i32 = arith.constant 0 : i32
    %c0_i32_0 = arith.constant 0 : i32
    %c0_i32_1 = arith.constant 0 : i32
    return %c0_i32, %c0_i32_0 : i32, i32
  }
  func.func @transform_5(%arg0: i32) -> (i32, i32) {
    %c0_i32 = arith.constant 0 : i32
    %c0_i32_0 = arith.constant 0 : i32
    %c0_i32_1 = arith.constant 0 : i32
    return %c0_i32, %c0_i32_0 : i32, i32
  }
  func.func @transform_6(%arg0: i32) -> (i32, i32) {
    %c0_i32 = arith.constant 0 : i32
    %c0_i32_0 = arith.constant 0 : i32
    %c0_i32_1 = arith.constant 0 : i32
    return %c0_i32, %c0_i32_0 : i32, i32
  }
  func.func @transform_7(%arg0: i32) -> (i32, i32) {
    %c0_i32 = arith.constant 0 : i32
    %c0_i32_0 = arith.constant 0 : i32
    return %arg0, %c0_i32 : i32, i32
  }
}

</mosaic_0001>

<llo_original>
// kernel: tpu_custom_call.1
$region0: #{tpu_custom_call.1}
  #allocation0 [shape = 'u32[]', space=smem, size = 0x4, offset = 0x4, fixed_abs, tag = 'smem constant byte address 0x4 - core index']
  #allocation1 [shape = 'u32[72,128]{1,0:T(1,128)}', space=vmem, size = 0x9000, scoped, tag = 'internal scratch']
  #allocation2 [shape = 'f32[1,1]{1,0:T(1,128)S(6)}', space=smem, size = 0x200, scoped, tag = 'scoped memory for tpu_custom_call.1']
  %s0 = inlined_call_operand.vmem [shape: f32[8,12], index: 0, kind: input, shape index: {}]
  %s1 = inlined_call_operand.vmem [shape: f32[8,4], index: 1, kind: input, shape index: {}]
  %s2 = inlined_call_operand.vmem [shape: f32[12,128], index: 2, kind: input, shape index: {}]
  %s3 = inlined_call_operand.vmem [shape: f32[4,128], index: 3, kind: input, shape index: {}]
  %s4 = inlined_call_operand.vmem [shape: f32[1,128], index: 4, kind: input, shape index: {}]
  %s5 = inlined_call_operand.vmem [shape: f32[128,1], index: 5, kind: input, shape index: {}]
  %s6 = inlined_call_operand.<no memory space> [shape: f32[1,1], index: 6, kind: input, shape index: {}]
  %s7 = inlined_call_operand.vmem [shape: f32[8,1], index: 7, kind: output, shape index: {}]
  %s8 = sld [smem:[#allocation0]]
  $region38: #{tpu_custom_call.1} parent=0
    _
  %s10 = ssub.s32 1, %s8
  %s11 = scalar_select 0, %s10, %s8
  %12 = sst [smem:[#allocation2]] %s6
  // Predicated region
  $region2: #{tpu_custom_call.1} parent=0 // pred_check
    _
  $region3: #{tpu_custom_call.1} parent=0 // pred_check_branch
    %14 = sbr.rel (0) target = $region5
  $region4: #{tpu_custom_call.1} parent=0 // pred_region
    _
  $region5: #{tpu_custom_call.1} parent=0 // pred_fallthru
    _
  // Predicated region
  $region6: #{tpu_custom_call.1} parent=0 // pred_check
    _
  $region7: #{tpu_custom_call.1} parent=0 // pred_check_branch
    %16 = sbr.rel (0) target = $region9
  $region8: #{tpu_custom_call.1} parent=0 // pred_region
    _
  $region9: #{tpu_custom_call.1} parent=0 // pred_fallthru
    _
  // Predicated region
  $region10: #{tpu_custom_call.1} parent=0 // pred_check
    _
  $region11: #{tpu_custom_call.1} parent=0 // pred_check_branch
    %18 = sbr.rel (0) target = $region13
  $region12: #{tpu_custom_call.1} parent=0 // pred_region
    _
  $region13: #{tpu_custom_call.1} parent=0 // pred_fallthru
    _
  // Predicated region
  $region14: #{tpu_custom_call.1} parent=0 // pred_check
    _
  $region15: #{tpu_custom_call.1} parent=0 // pred_check_branch
    %20 = sbr.rel (0) target = $region17
  $region16: #{tpu_custom_call.1} parent=0 // pred_region
    _
  $region17: #{tpu_custom_call.1} parent=0 // pred_fallthru
    _
  // Predicated region
  $region18: #{tpu_custom_call.1} parent=0 // pred_check
    _
  $region19: #{tpu_custom_call.1} parent=0 // pred_check_branch
    %22 = sbr.rel (0) target = $region21
  $region20: #{tpu_custom_call.1} parent=0 // pred_region
    _
  $region21: #{tpu_custom_call.1} parent=0 // pred_fallthru
    _
  // Predicated region
  $region22: #{tpu_custom_call.1} parent=0 // pred_check
    _
  $region23: #{tpu_custom_call.1} parent=0 // pred_check_branch
    %24 = sbr.rel (0) target = $region25
  $region24: #{tpu_custom_call.1} parent=0 // pred_region
    _
  $region25: #{tpu_custom_call.1} parent=0 // pred_fallthru
    _
  // Predicated region
  $region26: #{tpu_custom_call.1} parent=0 // pred_check
    _
  $region27: #{tpu_custom_call.1} parent=0 // pred_check_branch
    %26 = sbr.rel (0) target = $region29
  $region28: #{tpu_custom_call.1} parent=0 // pred_region
    _
  $region29: #{tpu_custom_call.1} parent=0 // pred_fallthru
    _
  %v27 = vld [vmem:[%s0] sm:$0xff]
  %v28 = vld [vmem:[%s2] sm:$0xff]
  %v29 = vld [vmem:[%s2 + $0x8] sm:$0xf]
  %v30 = vld [vmem:[%s1] sm:$0xff]
  %v31 = vld [vmem:[%s3] sm:$0xf]
  %vm32 = vcmask 31744
  %v34 = vsel %vm32, %v30, 0
  %vm36 = vcmask 1043456
  %v38 = vsel %vm36, %v31, 0
  %40 = vmatpush.msra.mxu0 0.0
  %41 = vmatpush.msra.mxu0 0.0
  %42 = vmatpush.msra.mxu0 0.0
  %43 = vmatpush.msra.mxu0 0.0
  %44 = vmatpush.msra.mxu0 0.0
  %45 = vmatpush.msra.mxu0 0.0
  %46 = vmatpush.msra.mxu0 0.0
  %47 = vmatpush.msra.mxu0 0.0
  %48 = vmatpush.msra.mxu0 0.0
  %49 = vmatpush.msra.mxu0 0.0
  %50 = vmatpush.msra.mxu0 0.0
  %51 = vmatpush.msra.mxu0 0.0
  %52 = vmatpush.msra.mxu0 0.0
  %53 = vmatpush.msra.mxu0 0.0
  %54 = vmatpush.msra.mxu0 0.0
  %55 = vmatpush.msra.mxu0 %v38
  %56 = vmatmul.f32.gmra.mxu0 %v34
  %v57 = vpop.f32.mrf.mxu0
  %v58 = vadd.f32 0.0, %v57
  %59 = vdwg.mxu0
  %vm60 = vcmask 97280
  %v62 = vsel %vm60, %v27, 0
  %v65 = vsel %vm36, %v29, 0
  %67 = vmatpush.msra.mxu0 0.0
  %68 = vmatpush.msra.mxu0 0.0
  %69 = vmatpush.msra.mxu0 0.0
  %70 = vmatpush.msra.mxu0 0.0
  %71 = vmatpush.msra.mxu0 0.0
  %72 = vmatpush.msra.mxu0 0.0
  %73 = vmatpush.msra.mxu0 0.0
  %74 = vmatpush.msra.mxu0 0.0
  %75 = vmatpush.msra.mxu0 0.0
  %76 = vmatpush.msra.mxu0 0.0
  %77 = vmatpush.msra.mxu0 0.0
  %78 = vmatpush.msra.mxu0 0.0
  %79 = vmatpush.msra.mxu0 0.0
  %80 = vmatpush.msra.mxu0 0.0
  %81 = vmatpush.msra.mxu0 %v65
  %82 = vmatpush.msra.mxu0 %v28
  %83 = vmatmul.f32.gmra.mxu0 %v62
  %v84 = vpop.f32.mrf.mxu0
  %v85 = vadd.f32 %v58, %v84
  %86 = vdwg.mxu0
  %v87 = vld [vmem:[%s4] sm:$0x1]
  %v89 = vperm.slane %v87, 0
  %v91 = vadd.f32 %v85, %v89
  %v92 = vmax.f32 %v91, 0.0
  %v93 = vld [vmem:[%s5] sm:$0xff]
  %v94 = vld [vmem:[%s5 + $0x8] sm:$0xff]
  %v95 = vld [vmem:[%s5 + $0x10] sm:$0xff]
  %v96 = vld [vmem:[%s5 + $0x18] sm:$0xff]
  %v97 = vld [vmem:[%s5 + $0x20] sm:$0xff]
  %v98 = vld [vmem:[%s5 + $0x28] sm:$0xff]
  %v99 = vld [vmem:[%s5 + $0x30] sm:$0xff]
  %v100 = vld [vmem:[%s5 + $0x38] sm:$0xff]
  %v101 = vld [vmem:[%s5 + $0x40] sm:$0xff]
  %v102 = vld [vmem:[%s5 + $0x48] sm:$0xff]
  %v103 = vld [vmem:[%s5 + $0x50] sm:$0xff]
  %v104 = vld [vmem:[%s5 + $0x58] sm:$0xff]
  %v105 = vld [vmem:[%s5 + $0x60] sm:$0xff]
  %v106 = vld [vmem:[%s5 + $0x68] sm:$0xff]
  %v107 = vld [vmem:[%s5 + $0x70] sm:$0xff]
  %v108 = vld [vmem:[%s5 + $0x78] sm:$0xff]
  %s109 = sld [smem:[#allocation2]]
  %v110 = vstv %s109
  %111 = vmatpush.msra.mxu0 %v108
  %112 = vmatpush.msra.mxu0 %v107
  %113 = vmatpush.msra.mxu0 %v106
  %114 = vmatpush.msra.mxu0 %v105
  %115 = vmatpush.msra.mxu0 %v104
  %116 = vmatpush.msra.mxu0 %v103
  %117 = vmatpush.msra.mxu0 %v102
  %118 = vmatpush.msra.mxu0 %v101
  %119 = vmatpush.msra.mxu0 %v100
  %120 = vmatpush.msra.mxu0 %v99
  %121 = vmatpush.msra.mxu0 %v98
  %122 = vmatpush.msra.mxu0 %v97
  %123 = vmatpush.msra.mxu0 %v96
  %124 = vmatpush.msra.mxu0 %v95
  %125 = vmatpush.msra.mxu0 %v94
  %126 = vmatpush.msra.mxu0 %v93
  %127 = vmatmul.f32.gmra.mxu0 %v92
  %v128 = vpop.f32.mrf.mxu0
  %v129 = vadd.f32 %v110, %v128
  %130 = vdwg.mxu0
  %vm131 = vcmask 7168
  %132 = vst.msk [vmem:[%s7] sm:$0xff] %vm131, %v129
  // Predicated region
  $region30: #{tpu_custom_call.1} parent=0 // pred_check
    _
  $region31: #{tpu_custom_call.1} parent=0 // pred_check_branch
    %134 = sbr.rel (0) target = $region33
  $region32: #{tpu_custom_call.1} parent=0 // pred_region
    _
  $region33: #{tpu_custom_call.1} parent=0 // pred_fallthru
    _
  // Predicated region
  $region34: #{tpu_custom_call.1} parent=0 // pred_check
    _
  $region35: #{tpu_custom_call.1} parent=0 // pred_check_branch
    %136 = sbr.rel (0) target = $region37
  $region36: #{tpu_custom_call.1} parent=0 // pred_region
    _
  $region37: #{tpu_custom_call.1} parent=0 // pred_fallthru
    _

</llo_original>
